<compile_context>
chip_gen: v7x
topology: tpu7x:2x2x1
jax: 0.10.0
libtpu: 0.0.40
codegen_flags: <defaults>
</compile_context>

<pallas_src>
import math

import jax
import jax.numpy as jnp
from jax.experimental import pallas as pl
from jax.experimental.pallas import tpu as pltpu


_GELU_C = math.sqrt(2.0 / math.pi)


def _round_up(n, m):
    return ((n + m - 1) // m) * m


def _gelu_tanh(h):
    # GELU(approximate='tanh'): 0.5*x*(1 + tanh(sqrt(2/pi)*(x + 0.044715*x^3)))
    return 0.5 * h * (1.0 + jnp.tanh(_GELU_C * (h + 0.044715 * (h * h * h))))


def _mlp_kernel_single(x_ref, wfc_ref, bfc_ref, wproj_ref, bproj_ref, o_ref):
    # Whole hidden dim resident: one pass, no accumulator scratch needed.
    h = jnp.dot(x_ref[...], wfc_ref[...], preferred_element_type=jnp.float32)
    h = h + bfc_ref[...]
    g = _gelu_tanh(h)
    y = jnp.dot(g.astype(wproj_ref.dtype), wproj_ref[...],
                preferred_element_type=jnp.float32)
    o_ref[...] = (y + bproj_ref[...]).astype(o_ref.dtype)


def _mlp_kernel_accum(x_ref, wfc_ref, bfc_ref, wproj_ref, bproj_ref, o_ref,
                      acc_ref):
    # Hidden dim tiled; partial c_proj products accumulate in f32 VMEM scratch.
    k = pl.program_id(1)

    @pl.when(k == 0)
    def _init():
        acc_ref[...] = jnp.zeros_like(acc_ref)

    h = jnp.dot(x_ref[...], wfc_ref[...], preferred_element_type=jnp.float32)
    h = h + bfc_ref[...]                       # exact: per-H-tile bias slice
    g = _gelu_tanh(h)
    acc_ref[...] += jnp.dot(g.astype(wproj_ref.dtype), wproj_ref[...],
                            preferred_element_type=jnp.float32)

    @pl.when(k == pl.num_programs(1) - 1)
    def _finalize():
        o_ref[...] = (acc_ref[...] + bproj_ref[...]).astype(o_ref.dtype)


def _vmem_bytes(tm, th, C, H, comp_bytes, out_bytes, tiled):
    dbl = 2  # Pallas double-buffers each BlockSpec'd operand by default
    total = dbl * tm * C * comp_bytes          # x tile
    total += dbl * C * th * comp_bytes         # W_fc tile
    total += dbl * th * C * comp_bytes         # W_proj tile
    total += dbl * (th + C) * 4                # biases (f32)
    total += dbl * tm * C * out_bytes          # output tile
    if tiled:
        total += tm * C * 4                    # f32 accumulator scratch
    return total


def _pick_th(H, C, tm, comp_bytes, out_bytes, budget):
    # Prefer keeping the whole hidden dim resident (weights DMAed only once);
    # otherwise the largest lane-aligned divisor of H that fits the budget.
    if _vmem_bytes(tm, H, C, H, comp_bytes, out_bytes, tiled=False) <= budget:
        return H
    divisors = [t for t in range(128, H, 128) if H % t == 0]
    if not divisors:
        return H
    for t in sorted(divisors, reverse=True):
        if _vmem_bytes(tm, t, C, H, comp_bytes, out_bytes, True) <= budget:
            return t
    return divisors[0]


def mlp_forward(x, w_fc, b_fc, w_proj, b_proj, *, tm=256, th=None,
                compute_dtype=jnp.bfloat16, vmem_budget=32 * 1024 * 1024):
    """GPT-2 MLP: y = GELU_tanh(x @ w_fc + b_fc) @ w_proj + b_proj.

    x: [B, T, C]. Weights pre-transposed: w_fc [C, 4C], w_proj [4C, C].
    """
    B, T, C = x.shape
    H = w_fc.shape[1]
    assert w_fc.shape == (C, H) and w_proj.shape == (H, C)
    M = B * T

    out_dtype = x.dtype
    comp_bytes = jnp.dtype(compute_dtype).itemsize
    out_bytes = jnp.dtype(out_dtype).itemsize

    # Row tile: sublane-aligned; shrink to the problem when M is small,
    # otherwise pad M up so the last row tile is full (no ragged grid).
    tm = min(_round_up(tm, 8), _round_up(M, 8))
    M_pad = _round_up(M, tm)

    # Hidden tile: whole H when the VMEM budget allows, else lane-aligned tile.
    if th is None:
        th = _pick_th(H, C, tm, comp_bytes, out_bytes, vmem_budget)
    assert H % th == 0, "hidden tile must divide the hidden dim"
    assert th == H or th % 128 == 0, "hidden tile must be lane-aligned (128)"
    tiled_h = th != H

    x2d = x.reshape(M, C).astype(compute_dtype)
    if M_pad != M:
        x2d = jnp.pad(x2d, ((0, M_pad - M), (0, 0)))

    wfc = w_fc.astype(compute_dtype)
    wproj = w_proj.astype(compute_dtype)
    bfc2d = b_fc.reshape(1, H).astype(jnp.float32)
    bproj2d = b_proj.reshape(1, C).astype(jnp.float32)

    num_row_tiles = M_pad // tm
    weight_fetches = num_row_tiles if tiled_h else 1  # const index -> fetched once
    cost = pl.CostEstimate(
        flops=4 * M_pad * C * H,                # two matmuls, 2*M*C*H each
        transcendentals=M_pad * H,              # tanh
        bytes_accessed=(M_pad * C * comp_bytes                     # x
                        + weight_fetches * 2 * C * H * comp_bytes  # weights
                        + (H + C) * 4                              # biases
                        + M_pad * C * out_bytes),                  # output
    )
    vmem_est = _vmem_bytes(tm, th, C, H, comp_bytes, out_bytes, tiled_h)
    vmem_limit = int(min(64 * 1024 * 1024,
                         max(32 * 1024 * 1024, vmem_est + (8 << 20))))

    if tiled_h:
        grid = (num_row_tiles, H // th)                # reduction axis (H) last
        in_specs = [
            pl.BlockSpec((tm, C), lambda i, k: (i, 0)),  # x rows (resident over k)
            pl.BlockSpec((C, th), lambda i, k: (0, k)),  # W_fc H-tile
            pl.BlockSpec((1, th), lambda i, k: (0, k)),  # b_fc H-tile
            pl.BlockSpec((th, C), lambda i, k: (k, 0)),  # W_proj H-tile
            pl.BlockSpec((1, C), lambda i, k: (0, 0)),   # b_proj
        ]
        out_specs = pl.BlockSpec((tm, C), lambda i, k: (i, 0))
        scratch_shapes = [pltpu.VMEM((tm, C), jnp.float32)]
        kernel = _mlp_kernel_accum
        dim_sem = ("parallel", "arbitrary")
    else:
        grid = (num_row_tiles,)
        in_specs = [
            pl.BlockSpec((tm, C), lambda i: (i, 0)),     # x rows
            pl.BlockSpec((C, H), lambda i: (0, 0)),      # full W_fc, DMAed once
            pl.BlockSpec((1, H), lambda i: (0, 0)),      # b_fc
            pl.BlockSpec((H, C), lambda i: (0, 0)),      # full W_proj, DMAed once
            pl.BlockSpec((1, C), lambda i: (0, 0)),      # b_proj
        ]
        out_specs = pl.BlockSpec((tm, C), lambda i: (i, 0))
        scratch_shapes = []
        kernel = _mlp_kernel_single
        dim_sem = ("parallel",)

    out2d = pl.pallas_call(
        kernel,
        out_shape=jax.ShapeDtypeStruct((M_pad, C), out_dtype),
        grid_spec=pltpu.PrefetchScalarGridSpec(
            num_scalar_prefetch=0,
            grid=grid,
            in_specs=in_specs,
            out_specs=out_specs,
            scratch_shapes=scratch_shapes,
        ),
        compiler_params=pltpu.CompilerParams(
            dimension_semantics=dim_sem,
            vmem_limit_bytes=vmem_limit),
        cost_estimate=cost,
    )(x2d, wfc, bfc2d, wproj, bproj2d)

    if M_pad != M:
        out2d = out2d[:M]
    return out2d.reshape(B, T, C)


if __name__ == "__main__":
    # Small GPT-2-style config: n_embed=64, hidden=4*64=256, batch=2, seq=8.
    B, T, C = 2, 8, 64
    H = 4 * C

    key = jax.random.PRNGKey(0)
    kx, k1, k2, k3, k4 = jax.random.split(key, 5)

    x = jax.random.normal(kx, (B, T, C), dtype=jnp.float32)

    # Deterministic parameter init (nn.Linear-like scale), stored pre-transposed.
    w_fc = jax.random.normal(k1, (C, H), dtype=jnp.float32) * (1.0 / math.sqrt(C))
    b_fc = jax.random.normal(k2, (H,), dtype=jnp.float32) * 0.02
    w_proj = jax.random.normal(k3, (H, C), dtype=jnp.float32) * (1.0 / math.sqrt(H))
    b_proj = jax.random.normal(k4, (C,), dtype=jnp.float32) * 0.02

    # Path 1: whole hidden dim resident (single-pass kernel, auto-selected).
    out_single = mlp_forward(x, w_fc, b_fc, w_proj, b_proj)
    # Path 2: hidden-dim tiled accumulating kernel (th=128 -> 2 reduction steps).
    out_accum = mlp_forward(x, w_fc, b_fc, w_proj, b_proj, th=128)
    jax.block_until_ready((out_single, out_accum))

    # Reference 1: emulate the kernel's bf16 input/weight rounding with f32
    # math (mirrors the mixed-precision kernel -> tight tolerance).
    def _bf16(a):
        return a.astype(jnp.bfloat16).astype(jnp.float32)

    c = math.sqrt(2.0 / math.pi)
    h_ref = _bf16(x).reshape(-1, C) @ _bf16(w_fc) + b_fc
    g_ref = 0.5 * h_ref * (1.0 + jnp.tanh(c * (h_ref + 0.044715 * h_ref ** 3)))
    ref = (_bf16(g_ref) @ _bf16(w_proj) + b_proj).reshape(B, T, C)

    # Reference 2: pure-f32 torch-equivalent forward (loose tol for bf16 rounding).
    h32 = x.reshape(-1, C) @ w_fc + b_fc
    g32 = 0.5 * h32 * (1.0 + jnp.tanh(c * (h32 + 0.044715 * h32 ** 3)))
    ref32 = (g32 @ w_proj + b_proj).reshape(B, T, C)

    for out in (out_single, out_accum):
        assert jnp.allclose(out, ref, atol=2e-2, rtol=2e-2), \
            "mismatch vs bf16-emulated reference"
        assert jnp.allclose(out, ref32, atol=1e-1, rtol=1e-1), \
            "mismatch vs f32 reference"

    print("KERNEL_OK")
</pallas_src>

<mosaic_0001>
module attributes {stable_mosaic.version = 11 : i64} {
  func.func @_mlp_kernel_single(%arg0: i32, %arg1: memref<16x64xbf16, #tpu.memory_space<vmem>>, %arg2: memref<64x256xbf16, #tpu.memory_space<vmem>>, %arg3: memref<1x256xf32, #tpu.memory_space<vmem>>, %arg4: memref<256x64xbf16, #tpu.memory_space<vmem>>, %arg5: memref<1x64xf32, #tpu.memory_space<vmem>>, %arg6: memref<16x64xf32, #tpu.memory_space<vmem>>) attributes {dimension_semantics = [#tpu.dimension_semantics<parallel>], iteration_bounds = array<i64: 1>, scalar_prefetch = 0 : i64, scratch_operands = 0 : i64, tpu.core_type = #tpu.core_type<tc>, window_params = [{transform_indices = @transform_0, window_bounds = array<i64: 16, 64>}, {pipeline_mode = #tpu.pipeline_mode<synchronous>, transform_indices = @transform_1, window_bounds = array<i64: 64, 256>}, {pipeline_mode = #tpu.pipeline_mode<synchronous>, transform_indices = @transform_2, window_bounds = array<i64: 1, 256>}, {pipeline_mode = #tpu.pipeline_mode<synchronous>, transform_indices = @transform_3, window_bounds = array<i64: 256, 64>}, {pipeline_mode = #tpu.pipeline_mode<synchronous>, transform_indices = @transform_4, window_bounds = array<i64: 1, 64>}, {transform_indices = @transform_5, window_bounds = array<i64: 16, 64>}]} {
    %c0 = arith.constant 0 : index
    %c0_0 = arith.constant 0 : index
    %0 = vector.load %arg1[%c0, %c0_0] : memref<16x64xbf16, #tpu.memory_space<vmem>>, vector<16x64xbf16>
    %c0_1 = arith.constant 0 : index
    %c0_2 = arith.constant 0 : index
    %1 = vector.load %arg2[%c0_1, %c0_2] : memref<64x256xbf16, #tpu.memory_space<vmem>>, vector<64x256xbf16>
    %cst = arith.constant dense<0.000000e+00> : vector<16x256xf32>
    %2 = tpu.matmul %0, %1, %cst {dimension_numbers = #tpu.dot_dimension_numbers<[1], [0], [0], [1], [0, 0, 1, 1], [], []>} : vector<16x64xbf16>, vector<64x256xbf16>, vector<16x256xf32> -> vector<16x256xf32>
    %c0_3 = arith.constant 0 : index
    %c0_4 = arith.constant 0 : index
    %3 = vector.load %arg3[%c0_3, %c0_4] : memref<1x256xf32, #tpu.memory_space<vmem>>, vector<1x256xf32>
    %4 = vector.broadcast %3 : vector<1x256xf32> to vector<16x256xf32>
    %5 = arith.addf %2, %4 : vector<16x256xf32>
    %cst_5 = arith.constant 5.000000e-01 : f32
    %6 = vector.broadcast %cst_5 : f32 to vector<16x256xf32>
    %7 = arith.mulf %6, %5 : vector<16x256xf32>
    %8 = arith.mulf %5, %5 : vector<16x256xf32>
    %9 = arith.mulf %8, %5 : vector<16x256xf32>
    %cst_6 = arith.constant 4.471500e-02 : f32
    %10 = vector.broadcast %cst_6 : f32 to vector<16x256xf32>
    %11 = arith.mulf %10, %9 : vector<16x256xf32>
    %12 = arith.addf %5, %11 : vector<16x256xf32>
    %cst_7 = arith.constant 0.797884583 : f32
    %13 = vector.broadcast %cst_7 : f32 to vector<16x256xf32>
    %14 = arith.mulf %13, %12 : vector<16x256xf32>
    %15 = math.tanh %14 : vector<16x256xf32>
    %cst_8 = arith.constant 1.000000e+00 : f32
    %16 = vector.broadcast %cst_8 : f32 to vector<16x256xf32>
    %17 = arith.addf %16, %15 : vector<16x256xf32>
    %18 = arith.mulf %7, %17 : vector<16x256xf32>
    %19 = arith.truncf %18 : vector<16x256xf32> to vector<16x256xbf16>
    %c0_9 = arith.constant 0 : index
    %c0_10 = arith.constant 0 : index
    %20 = vector.load %arg4[%c0_9, %c0_10] : memref<256x64xbf16, #tpu.memory_space<vmem>>, vector<256x64xbf16>
    %cst_11 = arith.constant dense<0.000000e+00> : vector<16x64xf32>
    %21 = tpu.matmul %19, %20, %cst_11 {dimension_numbers = #tpu.dot_dimension_numbers<[1], [0], [0], [1], [0, 0, 1, 1], [], []>} : vector<16x256xbf16>, vector<256x64xbf16>, vector<16x64xf32> -> vector<16x64xf32>
    %c0_12 = arith.constant 0 : index
    %c0_13 = arith.constant 0 : index
    %22 = vector.load %arg5[%c0_12, %c0_13] : memref<1x64xf32, #tpu.memory_space<vmem>>, vector<1x64xf32>
    %23 = vector.broadcast %22 : vector<1x64xf32> to vector<16x64xf32>
    %24 = arith.addf %21, %23 : vector<16x64xf32>
    %c0_14 = arith.constant 0 : index
    %c0_15 = arith.constant 0 : index
    %25 = vector.load %arg6[%c0_14, %c0_15] : memref<16x64xf32, #tpu.memory_space<vmem>>, vector<16x64xf32>
    tpu.vector_store %arg6[%c0_14, %c0_15], %24 {strides = array<i32>} : memref<16x64xf32, #tpu.memory_space<vmem>>, vector<16x64xf32>,
    return
  }
  func.func @transform_0(%arg0: i32) -> (i32, i32) {
    %c0_i32 = arith.constant 0 : i32
    %c0_i32_0 = arith.constant 0 : i32
    return %arg0, %c0_i32 : i32, i32
  }
  func.func @transform_1(%arg0: i32) -> (i32, i32) {
    %c0_i32 = arith.constant 0 : i32
    %c0_i32_0 = arith.constant 0 : i32
    %c0_i32_1 = arith.constant 0 : i32
    return %c0_i32, %c0_i32_0 : i32, i32
  }
  func.func @transform_2(%arg0: i32) -> (i32, i32) {
    %c0_i32 = arith.constant 0 : i32
    %c0_i32_0 = arith.constant 0 : i32
    %c0_i32_1 = arith.constant 0 : i32
    return %c0_i32, %c0_i32_0 : i32, i32
  }
  func.func @transform_3(%arg0: i32) -> (i32, i32) {
    %c0_i32 = arith.constant 0 : i32
    %c0_i32_0 = arith.constant 0 : i32
    %c0_i32_1 = arith.constant 0 : i32
    return %c0_i32, %c0_i32_0 : i32, i32
  }
  func.func @transform_4(%arg0: i32) -> (i32, i32) {
    %c0_i32 = arith.constant 0 : i32
    %c0_i32_0 = arith.constant 0 : i32
    %c0_i32_1 = arith.constant 0 : i32
    return %c0_i32, %c0_i32_0 : i32, i32
  }
  func.func @transform_5(%arg0: i32) -> (i32, i32) {
    %c0_i32 = arith.constant 0 : i32
    %c0_i32_0 = arith.constant 0 : i32
    return %arg0, %c0_i32 : i32, i32
  }
}

</mosaic_0001>

<llo_original>
// kernel: tpu_custom_call.1
$region0: #{tpu_custom_call.1}
  #allocation0 [shape = 'u32[]', space=smem, size = 0x4, offset = 0x4, fixed_abs, tag = 'smem constant byte address 0x4 - core index']
  #allocation1 [shape = 'u32[144,128]{1,0:T(1,128)}', space=vmem, size = 0x12000, scoped, tag = 'internal scratch']
  %s0 = inlined_call_operand.vmem [shape: bf16[16,64], index: 0, kind: input, shape index: {}]
  %s1 = inlined_call_operand.vmem [shape: bf16[64,256], index: 1, kind: input, shape index: {}]
  %s2 = inlined_call_operand.vmem [shape: f32[1,256], index: 2, kind: input, shape index: {}]
  %s3 = inlined_call_operand.vmem [shape: bf16[256,64], index: 3, kind: input, shape index: {}]
  %s4 = inlined_call_operand.vmem [shape: f32[1,64], index: 4, kind: input, shape index: {}]
  %s5 = inlined_call_operand.hbm [shape: f32[16,64], index: 5, kind: output, shape index: {}]
  %s6 = sld [smem:[#allocation0]]
  $region30: #{tpu_custom_call.1} parent=0
    _
  %s8 = ssub.s32 1, %s6
  %s9 = scalar_select 0, %s8, %s6
  $region1: #{tpu_custom_call.1} parent=0
    #allocation2 [shape = 'u8[8192]{0}', space=vmem, size = 0x2000, scoped, tag = 'output window, operand 0, single buffered']
    #allocation3 [shape = 's32[1]{0}', space=sflag, size = 0x4, scoped, tag = 'scoped memory for tpu_custom_call.1']
    %10 = vsyncpa [#allocation3], 0
    // Predicated region
    $region2: #{tpu_custom_call.1} parent=1 // pred_check
      _
    $region3: #{tpu_custom_call.1} parent=1 // pred_check_branch
      %12 = sbr.rel (0) target = $region5
    $region4: #{tpu_custom_call.1} parent=1 // pred_region
      _
    $region5: #{tpu_custom_call.1} parent=1 // pred_fallthru
      _
    // Predicated region
    $region6: #{tpu_custom_call.1} parent=1 // pred_check
      _
    $region7: #{tpu_custom_call.1} parent=1 // pred_check_branch
      %14 = sbr.rel (0) target = $region9
    $region8: #{tpu_custom_call.1} parent=1 // pred_region
      _
    $region9: #{tpu_custom_call.1} parent=1 // pred_fallthru
      _
    // Predicated region
    $region10: #{tpu_custom_call.1} parent=1 // pred_check
      _
    $region11: #{tpu_custom_call.1} parent=1 // pred_check_branch
      %16 = sbr.rel (0) target = $region13
    $region12: #{tpu_custom_call.1} parent=1 // pred_region
      _
    $region13: #{tpu_custom_call.1} parent=1 // pred_fallthru
      _
    // Predicated region
    $region14: #{tpu_custom_call.1} parent=1 // pred_check
      _
    $region15: #{tpu_custom_call.1} parent=1 // pred_check_branch
      %18 = sbr.rel (0) target = $region17
    $region16: #{tpu_custom_call.1} parent=1 // pred_region
      _
    $region17: #{tpu_custom_call.1} parent=1 // pred_fallthru
      _
    // Predicated region
    $region18: #{tpu_custom_call.1} parent=1 // pred_check
      _
    $region19: #{tpu_custom_call.1} parent=1 // pred_check_branch
      %20 = sbr.rel (0) target = $region21
    $region20: #{tpu_custom_call.1} parent=1 // pred_region
      _
    $region21: #{tpu_custom_call.1} parent=1 // pred_fallthru
      _
    %v22 = vld [vmem:[%s0] sm:$0xf]
    %v23 = vld [vmem:[%s0 + $0x4] sm:$0xf]
    %v24 = vld [vmem:[%s1] sm:$0xff]
    %v25 = vld [vmem:[%s1 + $0x8] sm:$0xff]
    %v26 = vld [vmem:[%s1 + $0x10] sm:$0xff]
    %v27 = vld [vmem:[%s1 + $0x18] sm:$0xff]
    %v28 = vld [vmem:[%s1 + $0x20] sm:$0xff]
    %v29 = vld [vmem:[%s1 + $0x28] sm:$0xff]
    %v30 = vld [vmem:[%s1 + $0x30] sm:$0xff]
    %v31 = vld [vmem:[%s1 + $0x38] sm:$0xff]
    %v32 = vld [vmem:[%s2] sm:$0x3]
    %v34 = vlaneseq
    %v35 = vshrl.u32 %v34, 7
    %v36 = vsub.s32 0, %v35
    %v37 = vrot.slane %v32, %v36
    %v38 = vlaneseq
    %v39 = vshrl.u32 %v38, 7
    %v40 = vsub.s32 1, %v39
    %v41 = vrot.slane %v32, %v40
    %v46 = vunpack.c.l.b16 %v22
    %v47 = vunpack.c.l.b16 %v23
    %v48 = vpack.c.b16 %v47, %v46
    %v57 = vunpack.c.l.b16 %v24
    %v58 = vunpack.c.h.b16 %v24
    %v59 = vunpack.c.l.b16 %v25
    %v60 = vunpack.c.h.b16 %v25
    %v61 = vunpack.c.l.b16 %v26
    %v62 = vunpack.c.h.b16 %v26
    %v63 = vunpack.c.l.b16 %v27
    %v64 = vunpack.c.h.b16 %v27
    %v65 = vunpack.c.l.b16 %v28
    %v66 = vunpack.c.h.b16 %v28
    %v67 = vunpack.c.l.b16 %v29
    %v68 = vunpack.c.h.b16 %v29
    %v69 = vunpack.c.l.b16 %v30
    %v70 = vunpack.c.h.b16 %v30
    %v71 = vunpack.c.l.b16 %v31
    %v72 = vunpack.c.h.b16 %v31
    %v73 = vpack.c.b16 %v59, %v57
    %v74 = vpack.c.b16 %v60, %v58
    %v75 = vpack.c.b16 %v63, %v61
    %v76 = vpack.c.b16 %v64, %v62
    %v77 = vpack.c.b16 %v67, %v65
    %v78 = vpack.c.b16 %v68, %v66
    %v79 = vpack.c.b16 %v71, %v69
    %v80 = vpack.c.b16 %v72, %v70
    %vm89 = vcmask 523264
    %v91 = vsel %vm89, %v48, 0
    %93 = vmatprep.subr.bf16.mxu0 %v74
    %94 = vmatpush1.bf16.msra.mxu0 %v73
    %95 = vmatprep.subr.bf16.mxu0 %v76
    %96 = vmatpush1.bf16.msra.mxu0 %v75
    %97 = vmatprep.subr.bf16.mxu0 %v78
    %98 = vmatpush1.bf16.msra.mxu0 %v77
    %99 = vmatprep.subr.bf16.mxu0 %v80
    %100 = vmatpush1.bf16.msra.mxu0 %v79
    %101 = vmatprep.subr.bf16.mxu0 0
    %102 = vmatpush1.bf16.msra.mxu0 0
    %103 = vmatprep.subr.bf16.mxu0 0
    %104 = vmatpush1.bf16.msra.mxu0 0
    %105 = vmatprep.subr.bf16.mxu0 0
    %106 = vmatpush1.bf16.msra.mxu0 0
    %107 = vmatprep.subr.bf16.mxu0 0
    %108 = vmatpush1.bf16.msra.mxu0 0
    %109 = vmatprep.subr.bf16.mxu0 0
    %110 = vmatpush1.bf16.msra.mxu0 0
    %111 = vmatprep.subr.bf16.mxu0 0
    %112 = vmatpush1.bf16.msra.mxu0 0
    %113 = vmatprep.subr.bf16.mxu0 0
    %114 = vmatpush1.bf16.msra.mxu0 0
    %115 = vmatprep.subr.bf16.mxu0 0
    %116 = vmatpush1.bf16.msra.mxu0 0
    %117 = vmatprep.subr.bf16.mxu0 0
    %118 = vmatpush1.bf16.msra.mxu0 0
    %119 = vmatprep.subr.bf16.mxu0 0
    %120 = vmatpush1.bf16.msra.mxu0 0
    %121 = vmatprep.subr.bf16.mxu0 0
    %122 = vmatpush1.bf16.msra.mxu0 0
    %123 = vmatprep.subr.bf16.mxu0 0
    %124 = vmatpush1.bf16.msra.mxu0 0
    %125 = vmatprep.mubr.bf16.mxu0 0
    %126 = vmatmul.mubr.bf16.gmra.mrb[0].mxu0 %v91
    %v127 = vpop.f32.mrb[0].mxu0
    %v128 = vadd.f32 %v37, %v127
    %v129 = vpop.f32.mrb[0].mxu0
    %v130 = vadd.f32 %v41, %v129
    %v131 = vpop.f32.mrb[0].mxu0
    %v132 = vadd.f32 %v37, %v131
    %v133 = vpop.f32.mrb[0].mxu0
    %v134 = vadd.f32 %v41, %v133
    %135 = vdwg.mxu0
    %v136 = vmul.f32 %v128, 0.5
    %v137 = vmul.f32 %v130, 0.5
    %v138 = vmul.f32 %v132, 0.5
    %v139 = vmul.f32 %v134, 0.5
    %v140 = vmul.f32 %v128, %v128
    %v141 = vmul.f32 %v130, %v130
    %v142 = vmul.f32 %v132, %v132
    %v143 = vmul.f32 %v134, %v134
    %v144 = vmul.f32 %v140, %v128
    %v145 = vmul.f32 %v141, %v130
    %v146 = vmul.f32 %v142, %v132
    %v147 = vmul.f32 %v143, %v134
    %v148 = vmul.f32 %v144, 0.044715
    %v149 = vmul.f32 %v145, 0.044715
    %v150 = vmul.f32 %v146, 0.044715
    %v151 = vmul.f32 %v147, 0.044715
    %v152 = vadd.f32 %v128, %v148
    %v153 = vadd.f32 %v130, %v149
    %v154 = vadd.f32 %v132, %v150
    %v155 = vadd.f32 %v134, %v151
    %v156 = vmul.f32 %v152, 0.7978846
    %v157 = vmul.f32 %v153, 0.7978846
    %v158 = vmul.f32 %v154, 0.7978846
    %v159 = vmul.f32 %v155, 0.7978846
    %v160 = vtanh.pop %v156
    %v161 = vtanh.pop %v157
    %v162 = vtanh.pop %v158
    %v163 = vtanh.pop %v159
    %v164 = vadd.f32 %v160, 1.0
    %v165 = vadd.f32 %v161, 1.0
    %v166 = vadd.f32 %v162, 1.0
    %v167 = vadd.f32 %v163, 1.0
    %v168 = vmul.f32 %v136, %v164
    %v169 = vmul.f32 %v137, %v165
    %v170 = vmul.f32 %v138, %v166
    %v171 = vmul.f32 %v139, %v167
    %v172 = vpack.c.bf16 %v170, %v168
    %v173 = vpack.c.bf16 %v171, %v169
    %v174 = vld [vmem:[%s3] sm:$0xf]
    %v175 = vld [vmem:[%s3 + $0x4] sm:$0xf]
    %v176 = vld [vmem:[%s3 + $0x8] sm:$0xf]
    %v177 = vld [vmem:[%s3 + $0xc] sm:$0xf]
    %v178 = vld [vmem:[%s3 + $0x10] sm:$0xf]
    %v179 = vld [vmem:[%s3 + $0x14] sm:$0xf]
    %v180 = vld [vmem:[%s3 + $0x18] sm:$0xf]
    %v181 = vld [vmem:[%s3 + $0x1c] sm:$0xf]
    %v182 = vld [vmem:[%s3 + $0x20] sm:$0xf]
    %v183 = vld [vmem:[%s3 + $0x24] sm:$0xf]
    %v184 = vld [vmem:[%s3 + $0x28] sm:$0xf]
    %v185 = vld [vmem:[%s3 + $0x2c] sm:$0xf]
    %v186 = vld [vmem:[%s3 + $0x30] sm:$0xf]
    %v187 = vld [vmem:[%s3 + $0x34] sm:$0xf]
    %v188 = vld [vmem:[%s3 + $0x38] sm:$0xf]
    %v189 = vld [vmem:[%s3 + $0x3c] sm:$0xf]
    %v190 = vld [vmem:[%s3 + $0x40] sm:$0xf]
    %v191 = vld [vmem:[%s3 + $0x44] sm:$0xf]
    %v192 = vld [vmem:[%s3 + $0x48] sm:$0xf]
    %v193 = vld [vmem:[%s3 + $0x4c] sm:$0xf]
    %v194 = vld [vmem:[%s3 + $0x50] sm:$0xf]
    %v195 = vld [vmem:[%s3 + $0x54] sm:$0xf]
    %v196 = vld [vmem:[%s3 + $0x58] sm:$0xf]
    %v197 = vld [vmem:[%s3 + $0x5c] sm:$0xf]
    %v198 = vld [vmem:[%s3 + $0x60] sm:$0xf]
    %v199 = vld [vmem:[%s3 + $0x64] sm:$0xf]
    %v200 = vld [vmem:[%s3 + $0x68] sm:$0xf]
    %v201 = vld [vmem:[%s3 + $0x6c] sm:$0xf]
    %v202 = vld [vmem:[%s3 + $0x70] sm:$0xf]
    %v203 = vld [vmem:[%s3 + $0x74] sm:$0xf]
    %v204 = vld [vmem:[%s3 + $0x78] sm:$0xf]
    %v205 = vld [vmem:[%s3 + $0x7c] sm:$0xf]
    %v206 = vld [vmem:[%s4] sm:$0x1]
    %v208 = vlaneseq
    %v209 = vshrl.u32 %v208, 7
    %v210 = vsub.s32 0, %v209
    %v211 = vrot.slane %v206, %v210
    %v245 = vunpack.c.l.b16 %v174
    %v246 = vunpack.c.l.b16 %v175
    %v247 = vunpack.c.l.b16 %v176
    %v248 = vunpack.c.l.b16 %v177
    %v249 = vunpack.c.l.b16 %v178
    %v250 = vunpack.c.l.b16 %v179
    %v251 = vunpack.c.l.b16 %v180
    %v252 = vunpack.c.l.b16 %v181
    %v253 = vunpack.c.l.b16 %v182
    %v254 = vunpack.c.l.b16 %v183
    %v255 = vunpack.c.l.b16 %v184
    %v256 = vunpack.c.l.b16 %v185
    %v257 = vunpack.c.l.b16 %v186
    %v258 = vunpack.c.l.b16 %v187
    %v259 = vunpack.c.l.b16 %v188
    %v260 = vunpack.c.l.b16 %v189
    %v261 = vunpack.c.l.b16 %v190
    %v262 = vunpack.c.l.b16 %v191
    %v263 = vunpack.c.l.b16 %v192
    %v264 = vunpack.c.l.b16 %v193
    %v265 = vunpack.c.l.b16 %v194
    %v266 = vunpack.c.l.b16 %v195
    %v267 = vunpack.c.l.b16 %v196
    %v268 = vunpack.c.l.b16 %v197
    %v269 = vunpack.c.l.b16 %v198
    %v270 = vunpack.c.l.b16 %v199
    %v271 = vunpack.c.l.b16 %v200
    %v272 = vunpack.c.l.b16 %v201
    %v273 = vunpack.c.l.b16 %v202
    %v274 = vunpack.c.l.b16 %v203
    %v275 = vunpack.c.l.b16 %v204
    %v276 = vunpack.c.l.b16 %v205
    %v277 = vpack.c.b16 %v246, %v245
    %v278 = vpack.c.b16 %v248, %v247
    %v279 = vpack.c.b16 %v250, %v249
    %v280 = vpack.c.b16 %v252, %v251
    %v281 = vpack.c.b16 %v254, %v253
    %v282 = vpack.c.b16 %v256, %v255
    %v283 = vpack.c.b16 %v258, %v257
    %v284 = vpack.c.b16 %v260, %v259
    %v285 = vpack.c.b16 %v262, %v261
    %v286 = vpack.c.b16 %v264, %v263
    %v287 = vpack.c.b16 %v266, %v265
    %v288 = vpack.c.b16 %v268, %v267
    %v289 = vpack.c.b16 %v270, %v269
    %v290 = vpack.c.b16 %v272, %v271
    %v291 = vpack.c.b16 %v274, %v273
    %v292 = vpack.c.b16 %v276, %v275
    %309 = vmatprep.subr.bf16.mxu0 0
    %310 = vmatpush1.bf16.msra.mxu0 %v277
    %311 = vmatprep.subr.bf16.mxu0 0
    %312 = vmatpush1.bf16.msra.mxu0 %v278
    %313 = vmatprep.subr.bf16.mxu0 0
    %314 = vmatpush1.bf16.msra.mxu0 %v279
    %315 = vmatprep.subr.bf16.mxu0 0
    %316 = vmatpush1.bf16.msra.mxu0 %v280
    %317 = vmatprep.subr.bf16.mxu0 0
    %318 = vmatpush1.bf16.msra.mxu0 %v281
    %319 = vmatprep.subr.bf16.mxu0 0
    %320 = vmatpush1.bf16.msra.mxu0 %v282
    %321 = vmatprep.subr.bf16.mxu0 0
    %322 = vmatpush1.bf16.msra.mxu0 %v283
    %323 = vmatprep.subr.bf16.mxu0 0
    %324 = vmatpush1.bf16.msra.mxu0 %v284
    %325 = vmatprep.subr.bf16.mxu0 0
    %326 = vmatpush1.bf16.msra.mxu0 %v285
    %327 = vmatprep.subr.bf16.mxu0 0
    %328 = vmatpush1.bf16.msra.mxu0 %v286
    %329 = vmatprep.subr.bf16.mxu0 0
    %330 = vmatpush1.bf16.msra.mxu0 %v287
    %331 = vmatprep.subr.bf16.mxu0 0
    %332 = vmatpush1.bf16.msra.mxu0 %v288
    %333 = vmatprep.subr.bf16.mxu0 0
    %334 = vmatpush1.bf16.msra.mxu0 %v289
    %335 = vmatprep.subr.bf16.mxu0 0
    %336 = vmatpush1.bf16.msra.mxu0 %v290
    %337 = vmatprep.subr.bf16.mxu0 0
    %338 = vmatpush1.bf16.msra.mxu0 %v291
    %339 = vmatprep.subr.bf16.mxu0 0
    %340 = vmatpush1.bf16.msra.mxu0 %v292
    %341 = vmatprep.mubr.bf16.mxu0 %v173
    %342 = vmatmul.mubr.bf16.gmra.mrb[0].mxu0 %v172
    %v343 = vpop.f32.mrb[0].mxu0
    %v344 = vadd.f32 %v211, %v343
    %v345 = vpop.f32.mrb[0].mxu0
    %v346 = vpop.f32.mrb[0].mxu0
    %v347 = vadd.f32 %v211, %v346
    %v348 = vpop.f32.mrb[0].mxu0
    %349 = vdwg.mxu0
    %350 = vst.msk [vmem:[#allocation2] sm:$0xff] %vm89, %v344
    %351 = vst.msk [vmem:[#allocation2 + $0x8] sm:$0xff] %vm89, %v347
    // Predicated region
    $region22: #{tpu_custom_call.1} parent=1 // pred_check
      _
    $region23: #{tpu_custom_call.1} parent=1 // pred_check_branch
      %353 = sbr.rel (0) target = $region25
    $region24: #{tpu_custom_call.1} parent=1 // pred_region
      %s355 = ssub.s32 256, 256
      %356 = vsyncadd [#allocation3], %s355
      %s357 = sshll.u32 [#allocation2], 4
      %s358 = int_to_ptr.vmem [resolvable:$true] %s357
      %363 = dma.vmem_to_hbm [thread:$0]  %s358, 256, %s5, [#allocation3], 128, 128, 8
    $region25: #{tpu_custom_call.1} parent=1 // pred_fallthru
      _
    // Predicated region
    $region26: #{tpu_custom_call.1} parent=1 // pred_check
      _
    $region27: #{tpu_custom_call.1} parent=1 // pred_check_branch
      %365 = sbr.rel (0) target = $region29
    $region28: #{tpu_custom_call.1} parent=1 // pred_region
      %366 = dma.done [#allocation3], 256
    $region29: #{tpu_custom_call.1} parent=1 // pred_fallthru
      _
    %367 = vsyncpa [#allocation3], 1

</llo_original>
